<compile_context>
chip_gen: v7x
topology: tpu7x:2x2x1
jax: 0.10.0
libtpu: 0.0.40
codegen_flags: <defaults>
</compile_context>

<pallas_src>
import functools

import jax
import jax.numpy as jnp
from jax import lax
from jax.experimental import pallas as pl
from jax.experimental.pallas import tpu as pltpu

GAP_WEIGHT = 3.0
L_ECRAN_WEIGHT = 1.0
HUBER_BETA = 0.001        # SmoothL1Loss(beta=0.001)
PRECISION_TOL = 0.007     # clamp(|err| - 0.007, min=0)^2 penalty

LANES = 128
MAX_TILE_ROWS = 512       # 512x128 f32 = 256 KiB/input tile; x2 inputs x2 bufs ~ 1 MiB VMEM


def _dual_loss_kernel(pred_ref, targ_ref, out_ref, acc_ref, *,
                      inv_b, gap_weight, L_ecran_weight, precision_mode):
    i = pl.program_id(0)

    @pl.when(i == 0)
    def _init():
        acc_ref[...] = jnp.zeros_like(acc_ref)

    # Cast in-kernel so bf16 inputs only cost bf16 HBM bandwidth.
    pred = pred_ref[...].astype(jnp.float32)
    targ = targ_ref[...].astype(jnp.float32)

    d = pred - targ
    d2 = d * d

    # Row-major [B, 2] flatten => even lanes are "gap", odd lanes are "L_ecran"
    # (128 is even, so flat-index parity == lane parity).
    lane = lax.broadcasted_iota(jnp.int32, pred.shape, dimension=1)
    is_gap = (lane % 2) == 0

    if precision_mode:
        ad = jnp.abs(d)
        # SmoothL1(beta): 0.5*d^2/beta if |d| < beta else |d| - 0.5*beta
        # (division replaced by precomputed multiplier 0.5/beta)
        huber = jnp.where(ad < HUBER_BETA, d2 * (0.5 / HUBER_BETA),
                          ad - 0.5 * HUBER_BETA)
        excess = jnp.maximum(ad - PRECISION_TOL, 0.0)
        elem_gap = 0.5 * d2 + 0.3 * ad + 0.2 * huber + 2.0 * (excess * excess)
    else:
        elem_gap = d2
    elem_L = d2

    # Single fused element-wise accumulation (pure VALU); zero-padded tail
    # contributes exactly 0 to both buckets.
    acc_ref[...] += jnp.where(is_gap, elem_gap, elem_L)

    @pl.when(i == pl.num_programs(0) - 1)
    def _finalize():
        acc = acc_ref[...]
        # Two reductions total for the whole kernel (gap bucket, L bucket).
        gap_sum = jnp.sum(jnp.where(is_gap, acc, 0.0))
        L_sum = jnp.sum(jnp.where(is_gap, 0.0, acc))
        loss_gap = gap_sum * inv_b
        loss_L = L_sum * inv_b
        out_ref[0] = gap_weight * loss_gap + L_ecran_weight * loss_L
        out_ref[1] = loss_gap
        out_ref[2] = loss_L


def dual_parameter_loss(predictions, targets, *, gap_weight=GAP_WEIGHT,
                        L_ecran_weight=L_ECRAN_WEIGHT, precision_mode=True):
    """Returns (total_loss, loss_gap, loss_L_ecran) as float32 scalars."""
    assert predictions.shape == targets.shape
    assert predictions.ndim == 2 and predictions.shape[1] == 2
    B = predictions.shape[0]

    n_elems = 2 * B
    rows_needed = pl.cdiv(n_elems, LANES)
    if rows_needed <= MAX_TILE_ROWS:
        tile_rows = max(8, ((rows_needed + 7) // 8) * 8)   # sublane multiple
        padded_rows = tile_rows
    else:
        tile_rows = MAX_TILE_ROWS
        padded_rows = ((rows_needed + tile_rows - 1) // tile_rows) * tile_rows
    grid = (padded_rows // tile_rows,)
    padded_elems = padded_rows * LANES

    def to_slab(x):
        flat = x.reshape(-1)                       # free, contiguous reshape
        if padded_elems != n_elems:
            flat = jnp.pad(flat, (0, padded_elems - n_elems))   # zeros => 0 loss
        return flat.reshape(padded_rows, LANES)

    pred_slab = to_slab(predictions)   # keep native dtype; cast happens in-kernel
    targ_slab = to_slab(targets)

    kernel = functools.partial(
        _dual_loss_kernel,
        inv_b=1.0 / B,
        gap_weight=float(gap_weight),
        L_ecran_weight=float(L_ecran_weight),
        precision_mode=bool(precision_mode),
    )

    # TODO(synk): on v7x, a leading "parallel" grid axis over the two TensorCores
    # with per-core partial outputs would roughly halve the in-core portion.
    out = pl.pallas_call(
        kernel,
        grid=grid,
        out_shape=jax.ShapeDtypeStruct((3,), jnp.float32),
        in_specs=[
            pl.BlockSpec((tile_rows, LANES), lambda i: (i, 0)),
            pl.BlockSpec((tile_rows, LANES), lambda i: (i, 0)),
        ],
        out_specs=pl.BlockSpec((3,), lambda i: (0,),
                               memory_space=pltpu.MemorySpace.SMEM),
        scratch_shapes=[pltpu.VMEM((tile_rows, LANES), jnp.float32)],
        compiler_params=pltpu.CompilerParams(
            dimension_semantics=("arbitrary",),
            vmem_limit_bytes=32 * 1024 * 1024),
    )(pred_slab, targ_slab)

    return out[0], out[1], out[2]


def _reference(predictions, targets, gap_weight=GAP_WEIGHT,
               L_ecran_weight=L_ECRAN_WEIGHT, precision_mode=True):
    """Pure-JAX reference mirroring the PyTorch module."""
    p = predictions.astype(jnp.float32)
    t = targets.astype(jnp.float32)
    pg, pL = p[:, 0], p[:, 1]
    tg, tL = t[:, 0], t[:, 1]
    d = pg - tg
    a = jnp.abs(d)
    if precision_mode:
        mse = jnp.mean(d ** 2)
        mae = jnp.mean(a)
        huber = jnp.mean(jnp.where(a < HUBER_BETA, 0.5 * d * d / HUBER_BETA,
                                   a - 0.5 * HUBER_BETA))
        loss_gap = 0.5 * mse + 0.3 * mae + 0.2 * huber
        pen = jnp.mean(jnp.maximum(a - PRECISION_TOL, 0.0) ** 2)
        loss_gap = loss_gap + 2.0 * pen
    else:
        loss_gap = jnp.mean(d ** 2)
    loss_L = jnp.mean((pL - tL) ** 2)
    total = gap_weight * loss_gap + L_ecran_weight * loss_L
    return total, loss_gap, loss_L


if __name__ == "__main__":
    key = jax.random.PRNGKey(0)
    kp, kt = jax.random.split(key)

    # Small case consistent with the module: [batch_size, 2]
    B = 8
    predictions = jax.random.uniform(kp, (B, 2), jnp.float32, 0.0, 1.0)
    targets = predictions + 0.01 * jax.random.normal(kt, (B, 2), jnp.float32)

    total, loss_gap, loss_L = dual_parameter_loss(predictions, targets)
    jax.block_until_ready((total, loss_gap, loss_L))

    ref_total, ref_gap, ref_L = _reference(predictions, targets)
    assert jnp.allclose(total, ref_total, rtol=1e-5, atol=1e-6), (total, ref_total)
    assert jnp.allclose(loss_gap, ref_gap, rtol=1e-5, atol=1e-6), (loss_gap, ref_gap)
    assert jnp.allclose(loss_L, ref_L, rtol=1e-5, atol=1e-6), (loss_L, ref_L)

    # Larger case that exercises the multi-block accumulation path (grid > 1).
    kp2, kt2 = jax.random.split(jax.random.PRNGKey(1))
    B2 = 40000
    p2 = jax.random.uniform(kp2, (B2, 2), jnp.float32, 0.0, 1.0)
    t2 = p2 + 0.01 * jax.random.normal(kt2, (B2, 2), jnp.float32)
    out2 = dual_parameter_loss(p2, t2)
    jax.block_until_ready(out2)
    ref2 = _reference(p2, t2)
    for got, want in zip(out2, ref2):
        assert jnp.allclose(got, want, rtol=3e-4, atol=1e-6), (got, want)

    print("KERNEL_OK")
</pallas_src>

<mosaic_0001>
module attributes {stable_mosaic.version = 11 : i64} {
  func.func @_dual_loss_kernel(%arg0: i32, %arg1: memref<8x128xf32, #tpu.memory_space<vmem>>, %arg2: memref<8x128xf32, #tpu.memory_space<vmem>>, %arg3: memref<3xf32, #tpu.memory_space<smem>>, %arg4: memref<8x128xf32, #tpu.memory_space<vmem>>) attributes {dimension_semantics = [#tpu.dimension_semantics<arbitrary>], iteration_bounds = array<i64: 1>, scalar_prefetch = 0 : i64, scratch_operands = 1 : i64, tpu.core_type = #tpu.core_type<tc>, window_params = [{transform_indices = @transform_0, window_bounds = array<i64: 8, 128>}, {transform_indices = @transform_1, window_bounds = array<i64: 8, 128>}, {transform_indices = @transform_2, window_bounds = array<i64: 3>}]} {
    %c0_i32 = arith.constant 0 : i32
    %0 = arith.cmpi eq, %arg0, %c0_i32 : i32
    %1 = arith.extui %0 : i1 to i32
    %c0_i32_0 = arith.constant 0 : i32
    %2 = arith.cmpi ne, %1, %c0_i32_0 : i32
    scf.if %2 {
      %cst_23 = arith.constant 0.000000e+00 : f32
      %57 = vector.broadcast %cst_23 : f32 to vector<8x128xf32>
      %c0_24 = arith.constant 0 : index
      %c0_25 = arith.constant 0 : index
      %58 = vector.load %arg4[%c0_24, %c0_25] : memref<8x128xf32, #tpu.memory_space<vmem>>, vector<8x128xf32>
      tpu.vector_store %arg4[%c0_24, %c0_25], %57 {strides = array<i32>} : memref<8x128xf32, #tpu.memory_space<vmem>>, vector<8x128xf32>,
    } else {
    }
    %c0 = arith.constant 0 : index
    %c0_1 = arith.constant 0 : index
    %3 = vector.load %arg1[%c0, %c0_1] : memref<8x128xf32, #tpu.memory_space<vmem>>, vector<8x128xf32>
    %c0_2 = arith.constant 0 : index
    %c0_3 = arith.constant 0 : index
    %4 = vector.load %arg2[%c0_2, %c0_3] : memref<8x128xf32, #tpu.memory_space<vmem>>, vector<8x128xf32>
    %5 = arith.subf %3, %4 : vector<8x128xf32>
    %6 = arith.mulf %5, %5 : vector<8x128xf32>
    %7 = tpu.iota {dimensions = array<i32: 1>} : vector<8x128xi32>
    %c2_i32 = arith.constant 2 : i32
    %c0_i32_4 = arith.constant 0 : i32
    %8 = arith.cmpi eq, %c2_i32, %c0_i32_4 : i32
    %c1_i32 = arith.constant 1 : i32
    %9 = arith.select %8, %c1_i32, %c2_i32 : i32
    %10 = vector.broadcast %9 : i32 to vector<8x128xi32>
    %11 = arith.remsi %7, %10 : vector<8x128xi32>
    %c0_i32_5 = arith.constant 0 : i32
    %12 = vector.broadcast %c0_i32_5 : i32 to vector<8x128xi32>
    %13 = arith.cmpi ne, %11, %12 : vector<8x128xi32>
    %c0_i32_6 = arith.constant 0 : i32
    %14 = vector.broadcast %c0_i32_6 : i32 to vector<8x128xi32>
    %15 = arith.cmpi slt, %11, %14 : vector<8x128xi32>
    %c0_i32_7 = arith.constant 0 : i32
    %16 = arith.cmpi slt, %9, %c0_i32_7 : i32
    %17 = vector.broadcast %16 : i1 to vector<8x128xi1>
    %18 = vector.broadcast %17 : vector<8x128xi1> to vector<8x128xi1>
    %19 = arith.xori %15, %18 : vector<8x128xi1>
    %20 = arith.andi %19, %13 : vector<8x128xi1>
    %21 = vector.broadcast %9 : i32 to vector<8x128xi32>
    %22 = arith.addi %11, %21 : vector<8x128xi32>
    %23 = arith.select %20, %22, %11 : vector<8x128xi1>, vector<8x128xi32>
    %c0_i32_8 = arith.constant 0 : i32
    %24 = vector.broadcast %c0_i32_8 : i32 to vector<8x128xi32>
    %25 = arith.cmpi eq, %23, %24 : vector<8x128xi32>
    %26 = math.absf %5 : vector<8x128xf32>
    %cst = arith.constant 1.000000e-03 : f32
    %27 = vector.broadcast %cst : f32 to vector<8x128xf32>
    %28 = arith.cmpf olt, %26, %27 : vector<8x128xf32>
    %cst_9 = arith.constant 5.000000e+02 : f32
    %29 = vector.broadcast %cst_9 : f32 to vector<8x128xf32>
    %30 = arith.mulf %6, %29 : vector<8x128xf32>
    %cst_10 = arith.constant 5.000000e-04 : f32
    %31 = vector.broadcast %cst_10 : f32 to vector<8x128xf32>
    %32 = arith.subf %26, %31 : vector<8x128xf32>
    %33 = arith.select %28, %30, %32 : vector<8x128xi1>, vector<8x128xf32>
    %cst_11 = arith.constant 7.000000e-03 : f32
    %34 = vector.broadcast %cst_11 : f32 to vector<8x128xf32>
    %35 = arith.subf %26, %34 : vector<8x128xf32>
    %cst_12 = arith.constant 0.000000e+00 : f32
    %36 = vector.broadcast %cst_12 : f32 to vector<8x128xf32>
    %37 = arith.maximumf %35, %36 : vector<8x128xf32>
    %cst_13 = arith.constant 5.000000e-01 : f32
    %38 = vector.broadcast %cst_13 : f32 to vector<8x128xf32>
    %39 = arith.mulf %38, %6 : vector<8x128xf32>
    %cst_14 = arith.constant 3.000000e-01 : f32
    %40 = vector.broadcast %cst_14 : f32 to vector<8x128xf32>
    %41 = arith.mulf %40, %26 : vector<8x128xf32>
    %42 = arith.addf %39, %41 : vector<8x128xf32>
    %cst_15 = arith.constant 2.000000e-01 : f32
    %43 = vector.broadcast %cst_15 : f32 to vector<8x128xf32>
    %44 = arith.mulf %43, %33 : vector<8x128xf32>
    %45 = arith.addf %42, %44 : vector<8x128xf32>
    %46 = arith.mulf %37, %37 : vector<8x128xf32>
    %cst_16 = arith.constant 2.000000e+00 : f32
    %47 = vector.broadcast %cst_16 : f32 to vector<8x128xf32>
    %48 = arith.mulf %47, %46 : vector<8x128xf32>
    %49 = arith.addf %45, %48 : vector<8x128xf32>
    %c0_17 = arith.constant 0 : index
    %c0_18 = arith.constant 0 : index
    %50 = vector.load %arg4[%c0_17, %c0_18] : memref<8x128xf32, #tpu.memory_space<vmem>>, vector<8x128xf32>
    %51 = arith.select %25, %49, %6 : vector<8x128xi1>, vector<8x128xf32>
    %52 = arith.addf %50, %51 : vector<8x128xf32>
    %c0_19 = arith.constant 0 : index
    %c0_20 = arith.constant 0 : index
    %53 = vector.load %arg4[%c0_19, %c0_20] : memref<8x128xf32, #tpu.memory_space<vmem>>, vector<8x128xf32>
    tpu.vector_store %arg4[%c0_19, %c0_20], %52 {strides = array<i32>} : memref<8x128xf32, #tpu.memory_space<vmem>>, vector<8x128xf32>,
    %c0_i32_21 = arith.constant 0 : i32
    %54 = arith.cmpi eq, %arg0, %c0_i32_21 : i32
    %55 = arith.extui %54 : i1 to i32
    %c0_i32_22 = arith.constant 0 : i32
    %56 = arith.cmpi ne, %55, %c0_i32_22 : i32
    scf.if %56 {
      %c0_23 = arith.constant 0 : index
      %c0_24 = arith.constant 0 : index
      %57 = vector.load %arg4[%c0_23, %c0_24] : memref<8x128xf32, #tpu.memory_space<vmem>>, vector<8x128xf32>
      %cst_25 = arith.constant 0.000000e+00 : f32
      %58 = vector.broadcast %cst_25 : f32 to vector<8x128xf32>
      %59 = arith.select %25, %57, %58 : vector<8x128xi1>, vector<8x128xf32>
      %60 = vector.shape_cast %59 : vector<8x128xf32> to vector<1x8x128xf32>
      %cst_26 = arith.constant dense<0.000000e+00> : vector<1xf32>
      %61 = vector.multi_reduction <add>, %60, %cst_26 [1, 2] : vector<1x8x128xf32> to vector<1xf32>
      %62 = vector.shape_cast %61 : vector<1xf32> to vector<1x1x1xf32>
      %63 = vector.extract %62[0, 0, 0] : f32 from vector<1x1x1xf32>
      %cst_27 = arith.constant 0.000000e+00 : f32
      %64 = vector.broadcast %cst_27 : f32 to vector<8x128xf32>
      %65 = arith.select %25, %64, %57 : vector<8x128xi1>, vector<8x128xf32>
      %66 = vector.shape_cast %65 : vector<8x128xf32> to vector<1x8x128xf32>
      %cst_28 = arith.constant dense<0.000000e+00> : vector<1xf32>
      %67 = vector.multi_reduction <add>, %66, %cst_28 [1, 2] : vector<1x8x128xf32> to vector<1xf32>
      %68 = vector.shape_cast %67 : vector<1xf32> to vector<1x1x1xf32>
      %69 = vector.extract %68[0, 0, 0] : f32 from vector<1x1x1xf32>
      %cst_29 = arith.constant 1.250000e-01 : f32
      %70 = arith.mulf %63, %cst_29 : f32
      %cst_30 = arith.constant 1.250000e-01 : f32
      %71 = arith.mulf %69, %cst_30 : f32
      %cst_31 = arith.constant 3.000000e+00 : f32
      %72 = arith.mulf %cst_31, %70 : f32
      %cst_32 = arith.constant 1.000000e+00 : f32
      %73 = arith.mulf %cst_32, %71 : f32
      %74 = arith.addf %72, %73 : f32
      %c0_33 = arith.constant 0 : index
      %75 = memref.load %arg3[%c0_33] : memref<3xf32, #tpu.memory_space<smem>>
      memref.store %74, %arg3[%c0_33] : memref<3xf32, #tpu.memory_space<smem>>
      %c1 = arith.constant 1 : index
      %76 = memref.load %arg3[%c1] : memref<3xf32, #tpu.memory_space<smem>>
      memref.store %70, %arg3[%c1] : memref<3xf32, #tpu.memory_space<smem>>
      %c2 = arith.constant 2 : index
      %77 = memref.load %arg3[%c2] : memref<3xf32, #tpu.memory_space<smem>>
      memref.store %71, %arg3[%c2] : memref<3xf32, #tpu.memory_space<smem>>
    } else {
    }
    return
  }
  func.func @transform_0(%arg0: i32) -> (i32, i32) {
    %c0_i32 = arith.constant 0 : i32
    %c0_i32_0 = arith.constant 0 : i32
    return %arg0, %c0_i32 : i32, i32
  }
  func.func @transform_1(%arg0: i32) -> (i32, i32) {
    %c0_i32 = arith.constant 0 : i32
    %c0_i32_0 = arith.constant 0 : i32
    return %arg0, %c0_i32 : i32, i32
  }
  func.func @transform_2(%arg0: i32) -> i32 {
    %c0_i32 = arith.constant 0 : i32
    %c0_i32_0 = arith.constant 0 : i32
    return %c0_i32 : i32
  }
}

</mosaic_0001>

<llo_original>
// kernel: tpu_custom_call.1
$region0: #{tpu_custom_call.1}
  #allocation0 [shape = 'u32[]', space=smem, size = 0x4, offset = 0x4, fixed_abs, tag = 'smem constant byte address 0x4 - core index']
  #allocation1 [shape = 'u32[144,128]{1,0:T(1,128)}', space=vmem, size = 0x12000, scoped, tag = 'internal scratch']
  #allocation2 [shape = 'f32[8,128]{1,0:T(8,128)}', space=vmem, size = 0x1000, scoped, tag = 'scratch operand']
  %s0 = inlined_call_operand.hbm [shape: f32[8,128], index: 0, kind: input, shape index: {}]
  %s1 = inlined_call_operand.hbm [shape: f32[8,128], index: 1, kind: input, shape index: {}]
  %s2 = inlined_call_operand.hbm [shape: f32[3], index: 2, kind: output, shape index: {}]
  %s3 = sld [smem:[#allocation0]]
  $region34: #{tpu_custom_call.1} parent=0
    _
  %s5 = ssub.s32 1, %s3
  %s6 = scalar_select 0, %s5, %s3
  $region1: #{tpu_custom_call.1} parent=0
    #allocation3 [shape = 'u8[4096]{0}', space=vmem, size = 0x1000, scoped, tag = 'input window, operand 0, single buffered']
    #allocation4 [shape = 's32[1]{0}', space=sflag, size = 0x4, scoped, tag = 'scoped memory for tpu_custom_call.1']
    #allocation5 [shape = 's32[1]{0}', space=sflag, size = 0x4, scoped, tag = 'scoped memory for tpu_custom_call.1']
    #allocation6 [shape = 'u8[4096]{0}', space=vmem, size = 0x1000, scoped, tag = 'input window, operand 1, single buffered']
    #allocation7 [shape = 's32[1]{0}', space=sflag, size = 0x4, scoped, tag = 'scoped memory for tpu_custom_call.1']
    #allocation8 [shape = 'u8[512]{0}', space=smem, size = 0x200, scoped, tag = 'output window, operand 0, single buffered']
    %7 = vsyncpa [#allocation4], 0
    %8 = vsyncpa [#allocation7], 0
    %9 = vsyncpa [#allocation5], 0
    // Predicated region
    $region2: #{tpu_custom_call.1} parent=1 // pred_check
      _
    $region3: #{tpu_custom_call.1} parent=1 // pred_check_branch
      %11 = sbr.rel (0) target = $region5
    $region4: #{tpu_custom_call.1} parent=1 // pred_region
      %s13 = ssub.s32 128, 128
      %14 = vsyncadd [#allocation4], %s13
      %s16 = sshll.u32 [#allocation3], 4
      %s17 = int_to_ptr.vmem [resolvable:$true] %s16
      %19 = dma.hbm_to_vmem [thread:$0]  %s0, 128, %s17, [#allocation4]
    $region5: #{tpu_custom_call.1} parent=1 // pred_fallthru
      _
    // Predicated region
    $region6: #{tpu_custom_call.1} parent=1 // pred_check
      _
    $region7: #{tpu_custom_call.1} parent=1 // pred_check_branch
      %21 = sbr.rel (0) target = $region9
    $region8: #{tpu_custom_call.1} parent=1 // pred_region
      %s23 = ssub.s32 128, 128
      %24 = vsyncadd [#allocation7], %s23
      %s26 = sshll.u32 [#allocation6], 4
      %s27 = int_to_ptr.vmem [resolvable:$true] %s26
      %29 = dma.hbm_to_vmem [thread:$0]  %s1, 128, %s27, [#allocation7]
    $region9: #{tpu_custom_call.1} parent=1 // pred_fallthru
      _
    // Predicated region
    $region10: #{tpu_custom_call.1} parent=1 // pred_check
      _
    $region11: #{tpu_custom_call.1} parent=1 // pred_check_branch
      %31 = sbr.rel (0) target = $region13
    $region12: #{tpu_custom_call.1} parent=1 // pred_region
      %32 = dma.done [#allocation4], 128
    $region13: #{tpu_custom_call.1} parent=1 // pred_fallthru
      _
    // Predicated region
    $region14: #{tpu_custom_call.1} parent=1 // pred_check
      _
    $region15: #{tpu_custom_call.1} parent=1 // pred_check_branch
      %34 = sbr.rel (0) target = $region17
    $region16: #{tpu_custom_call.1} parent=1 // pred_region
      %35 = dma.done [#allocation7], 128
    $region17: #{tpu_custom_call.1} parent=1 // pred_fallthru
      _
    %p36 = scmp.eq.s32.totalorder 0, 0
    // Predicated region
    $region18: #{tpu_custom_call.1} parent=1 // pred_check
      %p37 = pneg %p36
    $region19: #{tpu_custom_call.1} parent=1 // pred_check_branch
      %39 = sbr.rel (%p37) target = $region21
    $region20: #{tpu_custom_call.1} parent=1 // pred_region
      %40 = vst [vmem:[#allocation2] sm:$0xff] 0.0
    $region21: #{tpu_custom_call.1} parent=1 // pred_fallthru
      _
    %v41 = vld [vmem:[#allocation3] sm:$0xff]
    %v42 = vld [vmem:[#allocation6] sm:$0xff]
    %v43 = vsub.f32 %v41, %v42
    %v44 = vmul.f32 %v43, %v43
    %v45 = vlaneseq
    %v46 = vand.u32 %v45, 127
    %vm47 = vcmp.lt.s32.totalorder %v46, 0
    %v48 = vsub.s32 0, %v46
    %v49 = vsel %vm47, %v48, %v46
    %v50 = vshrl.u32 %v49, 1
    %v51 = vand.u32 %v49, 1
    %v52 = vsub.s32 0, %v51
    %v53 = vsel %vm47, %v52, %v51
    %vm54 = vcmp.ne.s32.totalorder %v53, 0
    %vm55 = vcmp.lt.s32.totalorder %v53, 0
    %vm56 = vmand %vm55, %vm54
    %v57 = vadd.s32 %v53, 2
    %v58 = vsel %vm56, %v57, %v53
    %vm59 = vcmp.eq.s32.totalorder %v58, 0
    %v60 = vand.u32 2147483647, %v43
    %vm61 = vcmp.lt.f32.partialorder %v60, 0.001
    %v62 = vmul.f32 %v44, 500.0
    %v63 = vsub.f32 %v60, 0.0005
    %v64 = vsel %vm61, %v62, %v63
    %v65 = vsub.f32 %v60, 0.007
    %v66 = vmax.f32 %v65, 0.0
    %v67 = vmul.f32 %v44, 0.5
    %v68 = vmul.f32 %v60, 0.3
    %v69 = vadd.f32 %v67, %v68
    %v70 = vmul.f32 %v64, 0.2
    %v71 = vadd.f32 %v69, %v70
    %v72 = vmul.f32 %v66, %v66
    %v73 = vmul.f32 %v72, 2.0
    %v74 = vadd.f32 %v71, %v73
    %v75 = vld [vmem:[#allocation2] sm:$0xff]
    %v76 = vsel %vm59, %v74, %v44
    %v77 = vadd.f32 %v75, %v76
    %78 = vst [vmem:[#allocation2] sm:$0xff] %v77
    // Predicated region
    $region22: #{tpu_custom_call.1} parent=1 // pred_check
      %p79 = pneg %p36
    $region23: #{tpu_custom_call.1} parent=1 // pred_check_branch
      %81 = sbr.rel (%p79) target = $region25
    $region24: #{tpu_custom_call.1} parent=1 // pred_region
      %v82 = vld [vmem:[#allocation2] sm:$0xff]
      %v83 = vsel %vm59, %v82, 0.0
      %84 = vadd.xlane.f32.xlu0 %v83
      %v85 = vpop.xlane.xlu0 %84
      %v86 = vrot.slane %v85, 4
      %v87 = vadd.f32 %v85, %v86
      %v88 = vrot.slane %v87, 2
      %v89 = vadd.f32 %v87, %v88
      %v90 = vrot.slane %v89, 1
      %v91 = vadd.f32 %v89, %v90
      %s92 = vtos %v91
      %v93 = vsel %vm59, 0.0, %v82
      %94 = vadd.xlane.f32.xlu0 %v93
      %v95 = vpop.xlane.xlu0 %94
      %v96 = vrot.slane %v95, 4
      %v97 = vadd.f32 %v95, %v96
      %v98 = vrot.slane %v97, 2
      %v99 = vadd.f32 %v97, %v98
      %v100 = vrot.slane %v99, 1
      %v101 = vadd.f32 %v99, %v100
      %s102 = vtos %v101
      %s103 = smul.f32 %s92, 0.125
      %s104 = smul.f32 %s102, 0.125
      %s105 = smul.f32 %s103, 3.0
      %s106 = sadd.f32 %s105, %s104
      %s107 = scalar_lea.smem [#allocation8], 0
      %108 = sst [smem:[%s107]] %s106
      %s109 = scalar_lea.smem [#allocation8], 1
      %110 = sst [smem:[%s109]] %s103
      %s111 = scalar_lea.smem [#allocation8], 2
      %112 = sst [smem:[%s111]] %s104
    $region25: #{tpu_custom_call.1} parent=1 // pred_fallthru
      _
    // Predicated region
    $region26: #{tpu_custom_call.1} parent=1 // pred_check
      _
    $region27: #{tpu_custom_call.1} parent=1 // pred_check_branch
      %114 = sbr.rel (0) target = $region29
    $region28: #{tpu_custom_call.1} parent=1 // pred_region
      %s116 = ssub.s32 16, 16
      %117 = vsyncadd [#allocation5], %s116
      %120 = dma.smem_to_hbm [#allocation8], 16, %s2, [#allocation5]
    $region29: #{tpu_custom_call.1} parent=1 // pred_fallthru
      _
    // Predicated region
    $region30: #{tpu_custom_call.1} parent=1 // pred_check
      _
    $region31: #{tpu_custom_call.1} parent=1 // pred_check_branch
      %122 = sbr.rel (0) target = $region33
    $region32: #{tpu_custom_call.1} parent=1 // pred_region
      %123 = dma.done [#allocation5], 16
    $region33: #{tpu_custom_call.1} parent=1 // pred_fallthru
      _
    %124 = sfence
    %125 = vsyncpa [#allocation4], 1
    %126 = vsyncpa [#allocation7], 1
    %127 = vsyncpa [#allocation5], 1

</llo_original>
